<compile_context>
chip_gen: v7x
topology: tpu7x:2x2x1
jax: 0.10.0
libtpu: 0.0.40
codegen_flags: <defaults>
</compile_context>

<pallas_src>
import functools

import jax
import jax.numpy as jnp
from jax import lax
from jax.experimental import pallas as pl
from jax.experimental.pallas import tpu as pltpu


def bert_embeddings_kernel(ids_ref,      # SMEM (scalar prefetch), (B*S,) int32
                           tt_ref,       # VMEM, (TILE_S, 1) int32
                           word_hbm,     # HBM (pl.ANY), (V, H) f32
                           pos_ref,      # VMEM, (TILE_S, H) f32 (pos-table slice)
                           type_ref,     # VMEM, (T, H) f32
                           gamma_ref,    # VMEM, (1, H) f32
                           beta_ref,     # VMEM, (1, H) f32
                           out_ref,      # VMEM, (TILE_S, H) f32
                           wbuf,         # VMEM scratch, (TILE_S, H) f32
                           sem,          # DMA semaphore, (1,)
                           *, seq_len, tile_s, eps):
    b = pl.program_id(0)
    sc = pl.program_id(1)
    base = b * seq_len + sc * tile_s

    # --- word embedding: DMA-gather TILE_S rows from the HBM-resident table.
    #     All row copies signal the same semaphore; one aggregate wait below.
    @pl.loop(0, tile_s)
    def _issue(r):
        idx = ids_ref[base + r]
        pltpu.make_async_copy(word_hbm.at[pl.ds(idx, 1), :],
                              wbuf.at[pl.ds(r, 1), :],
                              sem.at[0]).start()

    # --- work that does not need the gathered rows: pos slice + type select ---
    pos_e = pos_ref[...]                                   # (TILE_S, H)
    tt = tt_ref[...]                                       # (TILE_S, 1) int32
    n_types = type_ref.shape[0]
    type_e = jnp.zeros_like(pos_e)
    for t in range(n_types):                               # tiny static loop (T=2)
        type_e = jnp.where(tt == t, type_ref[t, :][None, :], type_e)
    partial = pos_e + type_e

    # --- single wait for all gather DMAs (descriptor shaped like full buffer
    #     consumes the combined byte count signalled on `sem`) ---
    pltpu.make_async_copy(wbuf, wbuf, sem.at[0]).wait()

    x = wbuf[...] + partial                                # (TILE_S, H)

    # --- fused LayerNorm over hidden dim (one-pass stats, biased variance) ---
    h = x.shape[-1]
    s1 = jnp.sum(x, axis=-1, keepdims=True)
    s2 = jnp.sum(x * x, axis=-1, keepdims=True)
    mean = s1 * (1.0 / h)
    var = s2 * (1.0 / h) - mean * mean
    inv = lax.rsqrt(var + eps)                             # EUP
    scale = inv * gamma_ref[...]                           # fold gamma into inv-std
    out_ref[...] = (x - mean) * scale + beta_ref[...]
    # TODO(synk): dropout(p=0.1) is identity in this forward path (module only
    # applies nn.Dropout when not training, where it is a no-op); omitted.
    # TODO(synk): the module's file-dump side effects (save_tensor_as_bin /
    # write) have no Pallas equivalent and are intentionally not reproduced.


def _pick_tile(seq_len):
    # largest row tile <= 256 that divides seq_len and is a multiple of 8
    for cand in (256, 128, 64, 32, 16, 8):
        if seq_len % cand == 0:
            return cand
    return seq_len


def bert_embeddings(input_ids, token_type_ids, params):
    B, S = input_ids.shape
    V, H = params["word"].shape
    T = params["type"].shape[0]
    tile_s = _pick_tile(S)
    n_chunks = S // tile_s

    ids_flat = input_ids.reshape(-1).astype(jnp.int32)           # SMEM prefetch
    tt_col = token_type_ids.reshape(-1, 1).astype(jnp.int32)     # (N, 1)
    word = params["word"].astype(jnp.float32)
    pos = params["pos"].astype(jnp.float32)
    typ = params["type"].astype(jnp.float32)
    gamma = params["gamma"].reshape(1, H).astype(jnp.float32)
    beta = params["beta"].reshape(1, H).astype(jnp.float32)

    grid_spec = pltpu.PrefetchScalarGridSpec(
        num_scalar_prefetch=1,
        grid=(B, n_chunks),
        in_specs=[
            # token-type ids: lane-1 column, row tile of this grid step
            pl.BlockSpec((tile_s, 1), lambda b, s, ids: (b * n_chunks + s, 0)),
            # word table: stays in HBM, gathered manually in-kernel
            pl.BlockSpec(memory_space=pl.ANY),
            # position table: direct slice keyed off the sequence-chunk index
            pl.BlockSpec((tile_s, H), lambda b, s, ids: (s, 0)),
            # tiny tables / LN params: resident, constant block index
            pl.BlockSpec((T, H), lambda b, s, ids: (0, 0)),
            pl.BlockSpec((1, H), lambda b, s, ids: (0, 0)),
            pl.BlockSpec((1, H), lambda b, s, ids: (0, 0)),
        ],
        out_specs=pl.BlockSpec((None, tile_s, H), lambda b, s, ids: (b, s, 0)),
        scratch_shapes=[
            pltpu.VMEM((tile_s, H), jnp.float32),
            pltpu.SemaphoreType.DMA((1,)),
        ],
    )

    out = pl.pallas_call(
        functools.partial(bert_embeddings_kernel,
                          seq_len=S, tile_s=tile_s, eps=1e-12),
        out_shape=jax.ShapeDtypeStruct((B, S, H), jnp.float32),
        grid_spec=grid_spec,
        compiler_params=pltpu.CompilerParams(
            dimension_semantics=("parallel", "parallel")),
    )(ids_flat, tt_col, word, pos, typ, gamma, beta)
    return out


def bert_embeddings_ref(input_ids, token_type_ids, params):
    # pure-JAX reference for validation
    B, S = input_ids.shape
    word_e = jnp.take(params["word"], input_ids, axis=0)
    pos_ids = jnp.arange(S, dtype=jnp.int32)[None, :]
    pos_e = jnp.take(params["pos"], pos_ids, axis=0)
    type_e = jnp.take(params["type"], token_type_ids, axis=0)
    x = word_e + pos_e + type_e
    mean = jnp.mean(x, axis=-1, keepdims=True)
    var = jnp.mean((x - mean) ** 2, axis=-1, keepdims=True)
    xn = (x - mean) * lax.rsqrt(var + 1e-12)
    return xn * params["gamma"] + params["beta"]


if __name__ == "__main__":
    # small BERT-like config
    VOCAB = 32
    MAX_POS = 16
    TYPE_VOCAB = 2
    HIDDEN = 128
    PAD_ID = 0
    B, S = 2, 8

    key = jax.random.PRNGKey(0)
    k_word, k_pos, k_type, k_ids, k_tt, k_g, k_b = jax.random.split(key, 7)

    word_table = 0.02 * jax.random.normal(k_word, (VOCAB, HIDDEN), jnp.float32)
    word_table = word_table.at[PAD_ID].set(0.0)  # padding_idx row zeroed (nn.Embedding)
    pos_table = 0.02 * jax.random.normal(k_pos, (MAX_POS, HIDDEN), jnp.float32)
    type_table = 0.02 * jax.random.normal(k_type, (TYPE_VOCAB, HIDDEN), jnp.float32)
    params = {
        "word": word_table,
        "pos": pos_table,
        "type": type_table,
        "gamma": 1.0 + 0.1 * jax.random.normal(k_g, (HIDDEN,), jnp.float32),
        "beta": 0.1 * jax.random.normal(k_b, (HIDDEN,), jnp.float32),
    }

    input_ids = jax.random.randint(k_ids, (B, S), 0, VOCAB, dtype=jnp.int32)
    token_type_ids = jax.random.randint(k_tt, (B, S), 0, TYPE_VOCAB, dtype=jnp.int32)

    out = bert_embeddings(input_ids, token_type_ids, params)
    out = jax.block_until_ready(out)

    ref = bert_embeddings_ref(input_ids, token_type_ids, params)
    assert out.shape == (B, S, HIDDEN)
    assert jnp.allclose(out, ref, atol=1e-5, rtol=1e-5), "mismatch vs reference"

    print("KERNEL_OK")
</pallas_src>

<mosaic_0001>
module attributes {stable_mosaic.version = 11 : i64} {
  func.func @bert_embeddings_kernel(%arg0: i32, %arg1: i32, %arg2: memref<16xi32, #tpu.memory_space<smem>>, %arg3: memref<8x1xi32, #tpu.memory_space<vmem>>, %arg4: memref<32x128xf32, #tpu.memory_space<any>>, %arg5: memref<8x128xf32, #tpu.memory_space<vmem>>, %arg6: memref<2x128xf32, #tpu.memory_space<vmem>>, %arg7: memref<1x128xf32, #tpu.memory_space<vmem>>, %arg8: memref<1x128xf32, #tpu.memory_space<vmem>>, %arg9: memref<1x8x128xf32, #tpu.memory_space<vmem>>, %arg10: memref<8x128xf32, #tpu.memory_space<vmem>>, %arg11: memref<1x!tpu.dma_semaphore, #tpu.memory_space<semaphore_mem>>) attributes {dimension_semantics = [#tpu.dimension_semantics<parallel>, #tpu.dimension_semantics<parallel>], iteration_bounds = array<i64: 2, 1>, scalar_prefetch = 1 : i64, scratch_operands = 2 : i64, tpu.core_type = #tpu.core_type<tc>, window_params = [{transform_indices = @transform_0, window_bounds = array<i64: 8, 1>}, {}, {transform_indices = @transform_2, window_bounds = array<i64: 8, 128>}, {pipeline_mode = #tpu.pipeline_mode<synchronous>, transform_indices = @transform_3, window_bounds = array<i64: 2, 128>}, {pipeline_mode = #tpu.pipeline_mode<synchronous>, transform_indices = @transform_4, window_bounds = array<i64: 1, 128>}, {pipeline_mode = #tpu.pipeline_mode<synchronous>, transform_indices = @transform_5, window_bounds = array<i64: 1, 128>}, {transform_indices = @transform_6, window_bounds = array<i64: 1, 8, 128>}]} {
    %c8_i32 = arith.constant 8 : i32
    %0 = arith.muli %arg0, %c8_i32 : i32
    %c8_i32_0 = arith.constant 8 : i32
    %1 = arith.muli %arg1, %c8_i32_0 : i32
    %2 = arith.addi %0, %1 : i32
    %c0_i32 = arith.constant 0 : i32
    %c8_i32_1 = arith.constant 8 : i32
    %3 = arith.addi %c0_i32, %c8_i32_1 : i32
    %c1_i32 = arith.constant 1 : i32
    scf.for %arg12 = %c0_i32 to %3 step %c1_i32  : i32 {
      %c1_i32_26 = arith.constant 1 : i32
      %59 = arith.muli %arg12, %c1_i32_26 : i32
      %c0_i32_27 = arith.constant 0 : i32
      %60 = arith.addi %c0_i32_27, %59 : i32
      %61 = arith.addi %2, %60 : i32
      %62 = arith.index_cast %61 : i32 to index
      %63 = memref.load %arg2[%62] : memref<16xi32, #tpu.memory_space<smem>>
      %c0_i32_28 = arith.constant 0 : i32
      %c0_i32_29 = arith.constant 0 : i32
      %64 = tpu.memref_slice %arg4[%63, %c0_i32_29] : memref<32x128xf32, #tpu.memory_space<any>> -> memref<1x128xf32, #tpu.memory_space<any>>
      %c0_i32_30 = arith.constant 0 : i32
      %65 = tpu.memref_slice %arg10[%60, %c0_i32_30] : memref<8x128xf32, #tpu.memory_space<vmem>> -> memref<1x128xf32, #tpu.memory_space<vmem>>
      %66 = tpu.memref_slice %arg11[%c0_i32_28] : memref<1x!tpu.dma_semaphore, #tpu.memory_space<semaphore_mem>> -> memref<1x!tpu.dma_semaphore, #tpu.memory_space<semaphore_mem>>
      %67 = tpu.memref_squeeze %66 : memref<1x!tpu.dma_semaphore, #tpu.memory_space<semaphore_mem>> -> memref<!tpu.dma_semaphore, #tpu.memory_space<semaphore_mem>>
      tpu.enqueue_dma source(%64 : memref<1x128xf32, #tpu.memory_space<any>>) target(%65 : memref<1x128xf32, #tpu.memory_space<vmem>>) target_semaphore(%67 : memref<!tpu.dma_semaphore, #tpu.memory_space<semaphore_mem>>)
    }
    %c8_i32_2 = arith.constant 8 : i32
    %c0 = arith.constant 0 : index
    %c0_3 = arith.constant 0 : index
    %4 = vector.load %arg5[%c0, %c0_3] : memref<8x128xf32, #tpu.memory_space<vmem>>, vector<8x128xf32>
    %c0_4 = arith.constant 0 : index
    %c0_5 = arith.constant 0 : index
    %5 = vector.load %arg3[%c0_4, %c0_5] : memref<8x1xi32, #tpu.memory_space<vmem>>, vector<8x1xi32>
    %cst = arith.constant 0.000000e+00 : f32
    %6 = vector.broadcast %cst : f32 to vector<8x128xf32>
    %c0_i32_6 = arith.constant 0 : i32
    %7 = vector.broadcast %c0_i32_6 : i32 to vector<8x1xi32>
    %8 = arith.cmpi eq, %5, %7 : vector<8x1xi32>
    %c0_7 = arith.constant 0 : index
    %c0_8 = arith.constant 0 : index
    %9 = vector.load %arg6[%c0_7, %c0_8] : memref<2x128xf32, #tpu.memory_space<vmem>>, vector<1x128xf32>
    %10 = vector.shape_cast %9 : vector<1x128xf32> to vector<128xf32>
    %11 = vector.shape_cast %10 : vector<128xf32> to vector<1x128xf32>
    %12 = vector.shape_cast %8 : vector<8x1xi1> to vector<8x1xi1>
    %13 = vector.broadcast %12 : vector<8x1xi1> to vector<8x128xi1>
    %14 = vector.shape_cast %11 : vector<1x128xf32> to vector<1x128xf32>
    %15 = vector.broadcast %14 : vector<1x128xf32> to vector<8x128xf32>
    %16 = arith.select %13, %15, %6 : vector<8x128xi1>, vector<8x128xf32>
    %c1_i32_9 = arith.constant 1 : i32
    %17 = vector.broadcast %c1_i32_9 : i32 to vector<8x1xi32>
    %18 = arith.cmpi eq, %5, %17 : vector<8x1xi32>
    %c1 = arith.constant 1 : index
    %c0_10 = arith.constant 0 : index
    %19 = vector.load %arg6[%c1, %c0_10] : memref<2x128xf32, #tpu.memory_space<vmem>>, vector<1x128xf32>
    %20 = vector.shape_cast %19 : vector<1x128xf32> to vector<128xf32>
    %21 = vector.shape_cast %20 : vector<128xf32> to vector<1x128xf32>
    %22 = vector.shape_cast %18 : vector<8x1xi1> to vector<8x1xi1>
    %23 = vector.broadcast %22 : vector<8x1xi1> to vector<8x128xi1>
    %24 = vector.shape_cast %21 : vector<1x128xf32> to vector<1x128xf32>
    %25 = vector.broadcast %24 : vector<1x128xf32> to vector<8x128xf32>
    %26 = arith.select %23, %25, %16 : vector<8x128xi1>, vector<8x128xf32>
    %27 = arith.addf %4, %26 : vector<8x128xf32>
    %c0_i32_11 = arith.constant 0 : i32
    %28 = tpu.memref_slice %arg11[%c0_i32_11] : memref<1x!tpu.dma_semaphore, #tpu.memory_space<semaphore_mem>> -> memref<1x!tpu.dma_semaphore, #tpu.memory_space<semaphore_mem>>
    %29 = tpu.memref_squeeze %28 : memref<1x!tpu.dma_semaphore, #tpu.memory_space<semaphore_mem>> -> memref<!tpu.dma_semaphore, #tpu.memory_space<semaphore_mem>>
    tpu.wait_dma2 semaphore(%29 : memref<!tpu.dma_semaphore, #tpu.memory_space<semaphore_mem>>) src(%arg10 : memref<8x128xf32, #tpu.memory_space<vmem>>) dst(%arg10 : memref<8x128xf32, #tpu.memory_space<vmem>>)
    %c0_12 = arith.constant 0 : index
    %c0_13 = arith.constant 0 : index
    %30 = vector.load %arg10[%c0_12, %c0_13] : memref<8x128xf32, #tpu.memory_space<vmem>>, vector<8x128xf32>
    %31 = arith.addf %30, %27 : vector<8x128xf32>
    %cst_14 = arith.constant dense<0.000000e+00> : vector<8xf32>
    %32 = vector.multi_reduction <add>, %31, %cst_14 [1] : vector<8x128xf32> to vector<8xf32>
    %33 = vector.shape_cast %32 : vector<8xf32> to vector<8x1xf32>
    %34 = arith.mulf %31, %31 : vector<8x128xf32>
    %cst_15 = arith.constant dense<0.000000e+00> : vector<8xf32>
    %35 = vector.multi_reduction <add>, %34, %cst_15 [1] : vector<8x128xf32> to vector<8xf32>
    %36 = vector.shape_cast %35 : vector<8xf32> to vector<8x1xf32>
    %cst_16 = arith.constant 7.812500e-03 : f32
    %37 = vector.broadcast %cst_16 : f32 to vector<8x1xf32>
    %38 = arith.mulf %33, %37 : vector<8x1xf32>
    %cst_17 = arith.constant 7.812500e-03 : f32
    %39 = vector.broadcast %cst_17 : f32 to vector<8x1xf32>
    %40 = arith.mulf %36, %39 : vector<8x1xf32>
    %41 = arith.mulf %38, %38 : vector<8x1xf32>
    %42 = arith.subf %40, %41 : vector<8x1xf32>
    %cst_18 = arith.constant 9.99999996E-13 : f32
    %43 = vector.broadcast %cst_18 : f32 to vector<8x1xf32>
    %44 = arith.addf %42, %43 : vector<8x1xf32>
    %45 = math.rsqrt %44 : vector<8x1xf32>
    %c0_19 = arith.constant 0 : index
    %c0_20 = arith.constant 0 : index
    %46 = vector.load %arg7[%c0_19, %c0_20] : memref<1x128xf32, #tpu.memory_space<vmem>>, vector<1x128xf32>
    %47 = vector.broadcast %45 : vector<8x1xf32> to vector<8x128xf32>
    %48 = vector.broadcast %46 : vector<1x128xf32> to vector<8x128xf32>
    %49 = arith.mulf %47, %48 : vector<8x128xf32>
    %50 = vector.broadcast %38 : vector<8x1xf32> to vector<8x128xf32>
    %51 = arith.subf %31, %50 : vector<8x128xf32>
    %52 = arith.mulf %51, %49 : vector<8x128xf32>
    %c0_21 = arith.constant 0 : index
    %c0_22 = arith.constant 0 : index
    %53 = vector.load %arg8[%c0_21, %c0_22] : memref<1x128xf32, #tpu.memory_space<vmem>>, vector<1x128xf32>
    %54 = vector.broadcast %53 : vector<1x128xf32> to vector<8x128xf32>
    %55 = arith.addf %52, %54 : vector<8x128xf32>
    %c0_23 = arith.constant 0 : index
    %c0_24 = arith.constant 0 : index
    %c0_25 = arith.constant 0 : index
    %56 = vector.load %arg9[%c0_23, %c0_24, %c0_25] : memref<1x8x128xf32, #tpu.memory_space<vmem>>, vector<1x8x128xf32>
    %57 = vector.shape_cast %56 : vector<1x8x128xf32> to vector<8x128xf32>
    %58 = vector.shape_cast %55 : vector<8x128xf32> to vector<1x8x128xf32>
    tpu.vector_store %arg9[%c0_23, %c0_24, %c0_25], %58 {strides = array<i32>} : memref<1x8x128xf32, #tpu.memory_space<vmem>>, vector<1x8x128xf32>,
    return
  }
  func.func @transform_0(%arg0: i32, %arg1: i32, %arg2: memref<16xi32, #tpu.memory_space<smem>>) -> (i32, i32) {
    %c1_i32 = arith.constant 1 : i32
    %0 = arith.muli %arg0, %c1_i32 : i32
    %1 = arith.addi %0, %arg1 : i32
    %c0_i32 = arith.constant 0 : i32
    %c0_i32_0 = arith.constant 0 : i32
    return %1, %c0_i32 : i32, i32
  }
  func.func @transform_2(%arg0: i32, %arg1: i32, %arg2: memref<16xi32, #tpu.memory_space<smem>>) -> (i32, i32) {
    %c0_i32 = arith.constant 0 : i32
    %c0_i32_0 = arith.constant 0 : i32
    return %arg1, %c0_i32 : i32, i32
  }
  func.func @transform_3(%arg0: i32, %arg1: i32, %arg2: memref<16xi32, #tpu.memory_space<smem>>) -> (i32, i32) {
    %c0_i32 = arith.constant 0 : i32
    %c0_i32_0 = arith.constant 0 : i32
    %c0_i32_1 = arith.constant 0 : i32
    return %c0_i32, %c0_i32_0 : i32, i32
  }
  func.func @transform_4(%arg0: i32, %arg1: i32, %arg2: memref<16xi32, #tpu.memory_space<smem>>) -> (i32, i32) {
    %c0_i32 = arith.constant 0 : i32
    %c0_i32_0 = arith.constant 0 : i32
    %c0_i32_1 = arith.constant 0 : i32
    return %c0_i32, %c0_i32_0 : i32, i32
  }
  func.func @transform_5(%arg0: i32, %arg1: i32, %arg2: memref<16xi32, #tpu.memory_space<smem>>) -> (i32, i32) {
    %c0_i32 = arith.constant 0 : i32
    %c0_i32_0 = arith.constant 0 : i32
    %c0_i32_1 = arith.constant 0 : i32
    return %c0_i32, %c0_i32_0 : i32, i32
  }
  func.func @transform_6(%arg0: i32, %arg1: i32, %arg2: memref<16xi32, #tpu.memory_space<smem>>) -> (i32, i32, i32) {
    %c0_i32 = arith.constant 0 : i32
    %c0_i32_0 = arith.constant 0 : i32
    return %arg0, %arg1, %c0_i32 : i32, i32, i32
  }
}

</mosaic_0001>

<llo_original>
// kernel: tpu_custom_call.1
$region0: #{tpu_custom_call.1}
  #allocation0 [shape = 'u32[]', space=smem, size = 0x4, offset = 0x4, fixed_abs, tag = 'smem constant byte address 0x4 - core index']
  #allocation1 [shape = 'u32[144,128]{1,0:T(1,128)}', space=vmem, size = 0x12000, scoped, tag = 'internal scratch']
  #allocation2 [shape = 'f32[8,128]{1,0:T(8,128)}', space=vmem, size = 0x1000, scoped, tag = 'scratch operand']
  #allocation3 [shape = 's32[1]{0}', space=sflag, size = 0x4, scoped, tag = 'scratch operand']
  #allocation4 [shape = 's32[1]{0}', space=sflag, size = 0x4, scoped, tag = 'scoped memory for tpu_custom_call.1']
  #allocation5 [shape = 'u8[512]{0}', space=smem, size = 0x200, scoped, tag = 'prefetched SMEM operand 0']
  #allocation8 [shape = 's32[]', space=sflag, size = 0x4, offset = 0, fixed_abs, tag = 'sflag constant byte address 0x0 - dummy sync flag']
  #allocation9 [shape = 's32[]', space=sflag, size = 0x4, offset = 0, fixed_abs, tag = 'sflag constant byte address 0x0 - dummy sync flag']
  #allocation10 [shape = 'u32[]', space=smem, size = 0x4, offset = 0x44, fixed_abs, tag = 'smem constant byte address 0x44 - assertion arg 0']
  #allocation11 [shape = 'u32[]', space=smem, size = 0x4, offset = 0x48, fixed_abs, tag = 'smem constant byte address 0x48 - assertion arg 1']
  %s0 = inlined_call_operand.vmem [shape: s32[16], index: 0, kind: input, shape index: {}]
  %s1 = inlined_call_operand.vmem [shape: s32[16,1], index: 1, kind: input, shape index: {}]
  %s2 = inlined_call_operand.hbm [shape: f32[32,128], index: 2, kind: input, shape index: {}]
  %s3 = inlined_call_operand.vmem [shape: f32[16,128], index: 3, kind: input, shape index: {}]
  %s4 = inlined_call_operand.vmem [shape: f32[2,128], index: 4, kind: input, shape index: {}]
  %s5 = inlined_call_operand.vmem [shape: f32[1,128], index: 5, kind: input, shape index: {}]
  %s6 = inlined_call_operand.vmem [shape: f32[1,128], index: 6, kind: input, shape index: {}]
  %s7 = inlined_call_operand.hbm [shape: f32[2,8,128], index: 7, kind: output, shape index: {}]
  %s8 = sld [smem:[#allocation0]]
  $region64: #{tpu_custom_call.1} parent=0
    _
  %s10 = ssub.s32 1, %s8
  %s11 = scalar_select 0, %s10, %s8
  %s12 = sshll.u32 %s0, 4
  %s13 = int_to_ptr.vmem [resolvable:$true] %s12
  %15 = dma.vmem_to_smem %s13, 16, [#allocation5], [#allocation4]
  %16 = dma.done [#allocation4], 16
  %17 = sfence
  $region1: #{tpu_custom_call.1} parent=0
    #allocation6 [shape = 'u8[8192]{0}', space=vmem, size = 0x2000, scoped, tag = 'output window, operand 0']
    #allocation7 [shape = 's32[2]{0}', space=sflag, size = 0x8, scoped, tag = 'scoped memory for tpu_custom_call.1']
    %18 = vsyncpa [#allocation7], 0
    %s19 = scalar_lea.sflag [#allocation7], 1
    %20 = vsyncpa %s19, 0
    loop: start=0, step=1, limit=4
    $region2: #{tpu_custom_call.1} parent=1 // loop_pre_header
      _
    $region3: #{tpu_custom_call.1} parent=1 // loop_header
      %s22 = sphi 0, %s26
      %p23 = scmp.ge.s32.totalorder %s22, 4
      %s29 = sphi 0, %s41
      %s30 = sphi 0, %s37
      %s31 = sphi 0, %s29
      %s32 = sphi 0, %s30
      %s33 = sphi 0, %s31
      %s34 = sphi 0, %s32
      %s46 = sphi 0, %s48
      %s49 = sphi 0, %s46
      %s50 = sphi 0, %s49
      %s66 = sphi 0, %s50
      %s72 = sphi 0, %s74
      %s75 = sphi 0, %s72
      %s76 = sphi 0, %s75
      %s92 = sphi 0, %s76
      %s96 = sphi 0, %s96
      %s98 = sphi 0, %s96
      %s99 = sphi 0, %s98
      %s113 = sphi 0, %s99
      %s117 = sphi 0, %s117
      %s119 = sphi 0, %s117
      %s120 = sphi 0, %s119
      %s134 = sphi 0, %s120
      %s138 = sphi 0, %s138
      %s140 = sphi 0, %s138
      %s141 = sphi 0, %s140
      %s155 = sphi 0, %s141
      %s163 = sphi 0, %s165
      %s166 = sphi 0, %s163
      %s167 = sphi 0, %s166
      %s183 = sphi 0, %s167
    $region4: #{tpu_custom_call.1} parent=1 // loop_header_branch
      %25 = sbr.rel (%p23) target = $region8
    $region5: #{tpu_custom_call.1} parent=1 // loop_body
      %s27 = ssub.s32 %s22, 1
      %s28 = ssub.s32 %s22, 2
      %s35 = sadd.s32 1, %s30
      %p36 = scmp.ge.s32.totalorder %s35, 1
      %s37 = scalar_select %p36, 0, %s35
      %s38 = sadd.s32 1, %s29
      %s39 = scalar_select %p36, %s38, %s29
      %p40 = scmp.ge.s32.totalorder %s39, 2
      %s41 = scalar_select %p40, 0, %s39
      %s42 = sadd.s32 %s29, %s30
      %s43 = sadd.s32 %s41, %s37
      %s44 = ssub.s32 %s42, %s43
      %p45 = scmp.eq.s32.totalorder %s44, 0
      %s47 = sadd.s32 %s46, 1
      %s48 = scalar_select %p45, %s46, %s47
      %p51 = pneg %p45
      %p52 = scmp.eq.s32.totalorder %s22, 1
      %p53 = por %p51, %p52
      %p54 = scmp.ne.s32.totalorder %s46, %s49
      %p55 = scmp.eq.s32.totalorder %s22, 0
      %p56 = por %p54, %p55
      %p57 = scmp.ne.s32.totalorder %s46, %s49
      %p58 = scmp.eq.s32.totalorder %s27, 1
      %p59 = por %p57, %p58
      %p60 = scmp.ne.s32.totalorder %s49, %s50
      %p61 = scmp.eq.s32.totalorder %s27, 0
      %p62 = por %p60, %p61
      %p63 = scmp.ne.s32.totalorder %s49, %s50
      %p64 = scmp.eq.s32.totalorder %s28, 1
      %p65 = por %p63, %p64
      %p67 = scmp.ne.s32.totalorder %s50, %s66
      %p68 = scmp.eq.s32.totalorder %s28, 0
      %p69 = por %p67, %p68
      %s70 = ssub.s32 %s30, %s37
      %p71 = scmp.eq.s32.totalorder %s70, 0
      %s73 = sadd.s32 %s72, 1
      %s74 = scalar_select %p71, %s72, %s73
      %p77 = pneg %p71
      %p78 = scmp.eq.s32.totalorder %s22, 1
      %p79 = por %p77, %p78
      %p80 = scmp.ne.s32.totalorder %s72, %s75
      %p81 = scmp.eq.s32.totalorder %s22, 0
      %p82 = por %p80, %p81
      %p83 = scmp.ne.s32.totalorder %s72, %s75
      %p84 = scmp.eq.s32.totalorder %s27, 1
      %p85 = por %p83, %p84
      %p86 = scmp.ne.s32.totalorder %s75, %s76
      %p87 = scmp.eq.s32.totalorder %s27, 0
      %p88 = por %p86, %p87
      %p89 = scmp.ne.s32.totalorder %s75, %s76
      %p90 = scmp.eq.s32.totalorder %s28, 1
      %p91 = por %p89, %p90
      %p93 = scmp.ne.s32.totalorder %s76, %s92
      %p94 = scmp.eq.s32.totalorder %s28, 0
      %p95 = por %p93, %p94
      %s97 = sadd.s32 %s96, 1
      %p100 = scmp.eq.s32.totalorder %s22, 1
      %p101 = scmp.ne.s32.totalorder %s96, %s98
      %p102 = scmp.eq.s32.totalorder %s22, 0
      %p103 = por %p101, %p102
      %p104 = scmp.ne.s32.totalorder %s96, %s98
      %p105 = scmp.eq.s32.totalorder %s27, 1
      %p106 = por %p104, %p105
      %p107 = scmp.ne.s32.totalorder %s98, %s99
      %p108 = scmp.eq.s32.totalorder %s27, 0
      %p109 = por %p107, %p108
      %p110 = scmp.ne.s32.totalorder %s98, %s99
      %p111 = scmp.eq.s32.totalorder %s28, 1
      %p112 = por %p110, %p111
      %p114 = scmp.ne.s32.totalorder %s99, %s113
      %p115 = scmp.eq.s32.totalorder %s28, 0
      %p116 = por %p114, %p115
      %s118 = sadd.s32 %s117, 1
      %p121 = scmp.eq.s32.totalorder %s22, 1
      %p122 = scmp.ne.s32.totalorder %s117, %s119
      %p123 = scmp.eq.s32.totalorder %s22, 0
      %p124 = por %p122, %p123
      %p125 = scmp.ne.s32.totalorder %s117, %s119
      %p126 = scmp.eq.s32.totalorder %s27, 1
      %p127 = por %p125, %p126
      %p128 = scmp.ne.s32.totalorder %s119, %s120
      %p129 = scmp.eq.s32.totalorder %s27, 0
      %p130 = por %p128, %p129
      %p131 = scmp.ne.s32.totalorder %s119, %s120
      %p132 = scmp.eq.s32.totalorder %s28, 1
      %p133 = por %p131, %p132
      %p135 = scmp.ne.s32.totalorder %s120, %s134
      %p136 = scmp.eq.s32.totalorder %s28, 0
      %p137 = por %p135, %p136
      %s139 = sadd.s32 %s138, 1
      %p142 = scmp.eq.s32.totalorder %s22, 1
      %p143 = scmp.ne.s32.totalorder %s138, %s140
      %p144 = scmp.eq.s32.totalorder %s22, 0
      %p145 = por %p143, %p144
      %p146 = scmp.ne.s32.totalorder %s138, %s140
      %p147 = scmp.eq.s32.totalorder %s27, 1
      %p148 = por %p146, %p147
      %p149 = scmp.ne.s32.totalorder %s140, %s141
      %p150 = scmp.eq.s32.totalorder %s27, 0
      %p151 = por %p149, %p150
      %p152 = scmp.ne.s32.totalorder %s140, %s141
      %p153 = scmp.eq.s32.totalorder %s28, 1
      %p154 = por %p152, %p153
      %p156 = scmp.ne.s32.totalorder %s141, %s155
      %p157 = scmp.eq.s32.totalorder %s28, 0
      %p158 = por %p156, %p157
      %s159 = ssub.s32 %s29, %s41
      %s160 = ssub.s32 %s30, %s37
      %s161 = sor.u32 %s159, %s160
      %p162 = scmp.eq.s32.totalorder %s161, 0
      %s164 = sadd.s32 %s163, 1
      %s165 = scalar_select %p162, %s163, %s164
      %p168 = pneg %p162
      %p169 = scmp.eq.s32.totalorder %s22, 1
      %p170 = por %p168, %p169
      %p171 = scmp.ne.s32.totalorder %s163, %s166
      %p172 = scmp.eq.s32.totalorder %s22, 0
      %p173 = por %p171, %p172
      %p174 = scmp.ne.s32.totalorder %s163, %s166
      %p175 = scmp.eq.s32.totalorder %s27, 1
      %p176 = por %p174, %p175
      %p177 = scmp.ne.s32.totalorder %s166, %s167
      %p178 = scmp.eq.s32.totalorder %s27, 0
      %p179 = por %p177, %p178
      %p180 = scmp.ne.s32.totalorder %s166, %s167
      %p181 = scmp.eq.s32.totalorder %s28, 1
      %p182 = por %p180, %p181
      %p184 = scmp.ne.s32.totalorder %s167, %s183
      %p185 = scmp.eq.s32.totalorder %s28, 0
      %p186 = por %p184, %p185
      %p187 = scmp.le.s32.totalorder 1, %s22
      %p188 = scmp.lt.s32.totalorder %s22, 3
      %p189 = pnand %p187, %p188
      %p190 = pneg %p189
      // Predicated region
      $region9: #{tpu_custom_call.1} parent=5 // pred_check
        _
      $region10: #{tpu_custom_call.1} parent=5 // pred_check_branch
        %192 = sbr.rel (%p189) target = $region12
      $region11: #{tpu_custom_call.1} parent=5 // pred_region
        %s193 = ssub.s32 %s22, 1
        // Predicated region
        $region13: #{tpu_custom_call.1} parent=11 // pred_check
          %p194 = pneg %p88
        $region14: #{tpu_custom_call.1} parent=11 // pred_check_branch
          %196 = sbr.rel (%p194) target = $region16
        $region15: #{tpu_custom_call.1} parent=11 // pred_region
          %p197 = scmp.lt.s32.totalorder %s32, 1
          %s198 = scalar_select %p197, %s32, 1
          %s199 = smul.addr %s198, 8
          %s200 = scalar_lea.vmem %s3, %s199
        $region16: #{tpu_custom_call.1} parent=11 // pred_fallthru
          _
        // Predicated region
        $region17: #{tpu_custom_call.1} parent=11 // pred_check
          %p201 = pneg %p109
        $region18: #{tpu_custom_call.1} parent=11 // pred_check_branch
          %203 = sbr.rel (%p201) target = $region20
        $region19: #{tpu_custom_call.1} parent=11 // pred_region
          _
        $region20: #{tpu_custom_call.1} parent=11 // pred_fallthru
          _
        // Predicated region
        $region21: #{tpu_custom_call.1} parent=11 // pred_check
          %p204 = pneg %p130
        $region22: #{tpu_custom_call.1} parent=11 // pred_check_branch
          %206 = sbr.rel (%p204) target = $region24
        $region23: #{tpu_custom_call.1} parent=11 // pred_region
          _
        $region24: #{tpu_custom_call.1} parent=11 // pred_fallthru
          _
        // Predicated region
        $region25: #{tpu_custom_call.1} parent=11 // pred_check
          %p207 = pneg %p151
        $region26: #{tpu_custom_call.1} parent=11 // pred_check_branch
          %209 = sbr.rel (%p207) target = $region28
        $region27: #{tpu_custom_call.1} parent=11 // pred_region
          _
        $region28: #{tpu_custom_call.1} parent=11 // pred_fallthru
          _
      $region12: #{tpu_custom_call.1} parent=5 // pred_fallthru
        _
      %p210 = scmp.lt.s32.totalorder %s22, 2
      // Predicated region
      $region29: #{tpu_custom_call.1} parent=5 // pred_check
        %p211 = pneg %p210
      $region30: #{tpu_custom_call.1} parent=5 // pred_check_branch
        %213 = sbr.rel (%p211) target = $region32
      $region31: #{tpu_custom_call.1} parent=5 // pred_region
        // Predicated region
        $region33: #{tpu_custom_call.1} parent=31 // pred_check
          %p214 = pneg %p56
        $region34: #{tpu_custom_call.1} parent=31 // pred_check_branch
          %216 = sbr.rel (%p214) target = $region36
        $region35: #{tpu_custom_call.1} parent=31 // pred_region
          %s217 = sadd.s32 %s29, %s30
          %p218 = scmp.lt.s32.totalorder %s217, 1
          %s219 = scalar_select %p218, %s217, 1
          %s220 = smul.addr %s219, 8
          %s221 = scalar_lea.vmem %s1, %s220
          %s222 = sadd.s32 %s29, %s30
        $region36: #{tpu_custom_call.1} parent=31 // pred_fallthru
          _
      $region32: #{tpu_custom_call.1} parent=5 // pred_fallthru
        _
      %p223 = scmp.le.s32.totalorder 1, %s22
      %p224 = scmp.lt.s32.totalorder %s22, 3
      %p225 = pnand %p223, %p224
      %p226 = pneg %p225
      // Predicated region
      $region37: #{tpu_custom_call.1} parent=5 // pred_check
        _
      $region38: #{tpu_custom_call.1} parent=5 // pred_check_branch
        %228 = sbr.rel (%p225) target = $region40
      $region39: #{tpu_custom_call.1} parent=5 // pred_region
        %s229 = ssub.s32 %s22, 1
        %s230 = sadd.s32 %s31, %s32
        %p231 = scmp.lt.s32.totalorder %s230, 1
        %s232 = scalar_select %p231, %s230, 1
        %s233 = smul.addr %s232, 8
        %s234 = scalar_lea.vmem %s1, %s233
        %p235 = pneg %p62
        %p236 = pneg %p59
        %p237 = scmp.lt.s32.totalorder %s32, 1
        %s238 = scalar_select %p237, %s32, 1
        %s239 = smul.addr %s238, 8
        %s240 = scalar_lea.vmem %s3, %s239
        %p241 = pneg %p88
        %p242 = pneg %p85
        %p243 = pneg %p109
        %p244 = pneg %p106
        %p245 = pneg %p130
        %p246 = pneg %p127
        %p247 = pneg %p151
        %p248 = pneg %p148
        %p249 = pneg %p179
        %p250 = pneg %p176
        %s251 = sand.u32 %s166, 1
        %s252 = scalar_lea.sflag [#allocation7], %s251
        %s253 = sand.u32 %s166, 1
        %s254 = smul.addr %s253, 8
        %s255 = scalar_lea.vmem [#allocation6], %s254
        %s256 = sadd.s32 %s31, %s32
        %p257 = scmp.lt.s32.totalorder %s256, 1
        %s258 = scalar_select %p257, %s256, 1
        %s259 = smul.addr %s258, 8
        %s260 = scalar_lea.vmem %s1, %s259
        %s261 = sadd.s32 %s31, %s32
        %p262 = scmp.lt.s32.totalorder %s32, 1
        %s263 = scalar_select %p262, %s32, 1
        %s264 = smul.addr %s263, 8
        %s265 = scalar_lea.vmem %s3, %s264
        %s266 = smul.u32 %s31, 8
        %s267 = smul.u32 %s32, 8
        %s268 = sadd.s32 %s266, %s267
        loop: start=0, step=1, limit=8
        $region41: #{tpu_custom_call.1} parent=39 // loop_pre_header
          _
        $region42: #{tpu_custom_call.1} parent=39 // loop_header
          %s270 = sphi 0, %s274
          %p271 = scmp.ge.s32.totalorder %s270, 8
        $region43: #{tpu_custom_call.1} parent=39 // loop_header_branch
          %273 = sbr.rel (%p271) target = $region47
        $region44: #{tpu_custom_call.1} parent=39 // loop_body
          %s275 = sadd.s32 %s268, %s270
          %s276 = sld [smem:[#allocation5 + %s275]]
          %s277 = smul.addr %s276, 16
          %s278 = scalar_lea.hbm %s2, %s277
          %s279 = scalar_lea.vmem [#allocation2], %s270
          // Predicated region
          $region48: #{tpu_custom_call.1} parent=44 // pred_check
            _
          $region49: #{tpu_custom_call.1} parent=44 // pred_check_branch
            %281 = sbr.rel target = $region51
          $region50: #{tpu_custom_call.1} parent=44 // pred_region
            %282 = sst [smem:[#allocation10]] [#allocation9]
            %283 = sst [smem:[#allocation11]] [#allocation8]
          $region51: #{tpu_custom_call.1} parent=44 // pred_fallthru
            _
          %285 = shalt.err (0)
          %s287 = sshll.u32 %s279, 4
          %s288 = int_to_ptr.vmem [resolvable:$true] %s287
          %290 = dma.hbm_to_vmem [thread:$0]  %s278, 16, %s288, [#allocation3]
        $region45: #{tpu_custom_call.1} parent=39 // loop_footer
          %s274 = sadd.s32 1, %s270
        $region46: #{tpu_custom_call.1} parent=39 // loop_footer_branch
          %269 = sbr.rel target = $region42
        $region47: #{tpu_custom_call.1} parent=39 // loop_exit
          _
        %v291 = vld [vmem:[%s265] sm:$0xff]
        %v292 = vld [vmem:[%s260] sm:$0xff]
        %vm293 = vcmp.eq.s32.totalorder %v292, 0
        %v294 = vld [vmem:[%s4] sm:$0x1]
        %v295 = vsel %vm293, 1, 0
        %296 = vset.pattern.permute.xlu0 0
        %297 = vperm.xlu0 %296, %v295
        %v298 = vpop.permute.xlu0 %297
        %vm299 = vcmp.eq.s32.totalorder %v298, 1
        %v300 = vlaneseq
        %v301 = vshrl.u32 %v300, 7
        %v302 = vsub.s32 0, %v301
        %v303 = vrot.slane %v294, %v302
        %v304 = vsel %vm299, %v303, 0.0
        %vm305 = vcmp.eq.s32.totalorder %v292, 1
        %v306 = vld [vmem:[%s4 + $0x1] sm:$0x1]
        %v307 = vsel %vm305, 1, 0
        %308 = vset.pattern.permute.xlu0 0
        %309 = vperm.xlu0 %308, %v307
        %v310 = vpop.permute.xlu0 %309
        %vm311 = vcmp.eq.s32.totalorder %v310, 1
        %v312 = vlaneseq
        %v313 = vshrl.u32 %v312, 7
        %v314 = vsub.s32 0, %v313
        %v315 = vrot.slane %v306, %v314
        %v316 = vsel %vm311, %v315, %v304
        %v317 = vadd.f32 %v291, %v316
        %s318 = smul.u32 8, 1
        %s319 = sshll.u32 %s318, 4
        %320 = dma.done [#allocation3], %s319
        %v321 = vld [vmem:[#allocation2] sm:$0xff]
        %v322 = vadd.f32 %v321, %v317
        %323 = vadd.xlane.f32.xlu0 %v322
        %v324 = vpop.xlane.xlu0 %323
        %v325 = vmul.f32 %v322, %v322
        %326 = vadd.xlane.f32.xlu0 %v325
        %v327 = vpop.xlane.xlu0 %326
        %v328 = vmul.f32 %v324, 0.0078125
        %v329 = vmul.f32 %v327, 0.0078125
        %v330 = vmul.f32 %v328, %v328
        %v331 = vsub.f32 %v329, %v330
        %v332 = vadd.f32 %v331, 1e-12
        %v333 = vrsqrt.pop %v332
        %v334 = vld [vmem:[%s5] sm:$0x1]
        %v336 = vlaneseq
        %v337 = vshrl.u32 %v336, 7
        %v338 = vsub.s32 0, %v337
        %v339 = vrot.slane %v334, %v338
        %v341 = vmul.f32 %v333, %v339
        %v342 = vsub.f32 %v322, %v328
        %v343 = vmul.f32 %v342, %v341
        %v344 = vld [vmem:[%s6] sm:$0x1]
        %v346 = vlaneseq
        %v347 = vshrl.u32 %v346, 7
        %v348 = vsub.s32 0, %v347
        %v349 = vrot.slane %v344, %v348
        %v351 = vadd.f32 %v343, %v349
        %352 = vst [vmem:[%s255] sm:$0xff] %v351
        %s353 = sand.u32 %s166, 1
        %s354 = scalar_lea.sflag [#allocation7], %s353
        %s355 = sand.u32 %s166, 1
        %s356 = smul.addr %s355, 8
        %s357 = scalar_lea.vmem [#allocation6], %s356
        // Predicated region
        $region52: #{tpu_custom_call.1} parent=39 // pred_check
          %p358 = pneg %p176
        $region53: #{tpu_custom_call.1} parent=39 // pred_check_branch
          %360 = sbr.rel (%p358) target = $region55
        $region54: #{tpu_custom_call.1} parent=39 // pred_region
          %s362 = ssub.s32 128, 128
          %363 = vsyncadd %s354, %s362
          %s364 = sadd.s32 %s32, %s31
          %s365 = smul.addr %s364, 128
          %s366 = scalar_lea.hbm %s7, %s365
          %s368 = sshll.u32 %s357, 4
          %s369 = int_to_ptr.vmem [resolvable:$true] %s368
          %371 = dma.vmem_to_hbm [thread:$0]  %s369, 128, %s366, %s354
        $region55: #{tpu_custom_call.1} parent=39 // pred_fallthru
          _
      $region40: #{tpu_custom_call.1} parent=5 // pred_fallthru
        _
      %p372 = scmp.le.s32.totalorder 2, %s22
      // Predicated region
      $region56: #{tpu_custom_call.1} parent=5 // pred_check
        %p373 = pneg %p372
      $region57: #{tpu_custom_call.1} parent=5 // pred_check_branch
        %375 = sbr.rel (%p373) target = $region59
      $region58: #{tpu_custom_call.1} parent=5 // pred_region
        %s376 = ssub.s32 %s22, 2
        // Predicated region
        $region60: #{tpu_custom_call.1} parent=58 // pred_check
          %p377 = pneg %p182
        $region61: #{tpu_custom_call.1} parent=58 // pred_check_branch
          %379 = sbr.rel (%p377) target = $region63
        $region62: #{tpu_custom_call.1} parent=58 // pred_region
          %s380 = sand.u32 %s167, 1
          %s381 = scalar_lea.sflag [#allocation7], %s380
          %s382 = sand.u32 %s167, 1
          %s383 = smul.addr %s382, 8
          %s384 = scalar_lea.vmem [#allocation6], %s383
          %385 = dma.done %s381, 128
        $region63: #{tpu_custom_call.1} parent=58 // pred_fallthru
          _
      $region59: #{tpu_custom_call.1} parent=5 // pred_fallthru
        _
    $region6: #{tpu_custom_call.1} parent=1 // loop_footer
      %s26 = sadd.s32 1, %s22
    $region7: #{tpu_custom_call.1} parent=1 // loop_footer_branch
      %21 = sbr.rel target = $region3
    $region8: #{tpu_custom_call.1} parent=1 // loop_exit
      _
    %386 = vsyncpa [#allocation7], 1
    %s387 = scalar_lea.sflag [#allocation7], 1
    %388 = vsyncpa %s387, 1
  %389 = vsyncmov [#allocation3]
  %s390 = vpop.sfrf %389
  %p391 = scmp.eq.s32.totalorder %s390, 0
  %p392 = pneg %p391
  %394 = shalt.err (%p392)

</llo_original>
